<compile_context>
chip_gen: v5e
topology: v5e:2x2
jax: 0.10.0
libtpu: 0.0.40
codegen_flags: <defaults>
</compile_context>

<pallas_src>
import functools

import jax
import jax.numpy as jnp
from jax.experimental import pallas as pl
from jax.experimental.pallas import tpu as pltpu


def _round_up(n, m):
    return (n + m - 1) // m * m


def _drc_kernel(x_ref, w_ref, b_ref, out_ref, *, K, k_star, dilation, L):
    # x_ref  : (Bt, Lp, Fp) f32  (seq zero-padded by `padding` on both sides,
    #                             features zero-padded to Fp = round_up(F,128))
    # w_ref  : (Fp, Cp) f32 or bf16 (zero-padded)
    # b_ref  : (1, Cp)  f32         (zero-padded)
    # out_ref: (Bt, L, Cp) f32
    eps2 = 1e-16                        # (1e-8)^2 clamp on squared-norm product
    w = w_ref[...]
    bias = b_ref[...]
    Bt = out_ref.shape[0]

    for bi in range(Bt):                # Bt is small & static -> unrolled
        # center tap k*: the only adj row kept by F.fold in the torch forward
        xc = x_ref[bi, pl.ds(k_star * dilation, L), :]               # (L, Fp)
        nc2 = jnp.sum(xc * xc, axis=-1, keepdims=True)               # (L, 1)

        # Hoist W out of the tap loop:
        #   sum_j adj_j * (x_j @ W) == (sum_j adj_j * x_j) @ W
        # j == k*: cos == 1 for every row -> softmax over L is exactly 1/L.
        y = xc * (1.0 / L)                                           # (L, Fp)

        for j in range(K):              # K is small & static -> unrolled
            if j == k_star:
                continue
            xj = x_ref[bi, pl.ds(j * dilation, L), :]                # (L, Fp)
            nj2 = jnp.sum(xj * xj, axis=-1, keepdims=True)           # (L, 1)
            dot = jnp.sum(xc * xj, axis=-1, keepdims=True)           # (L, 1)
            # cos = dot / max(|xc||xj|, eps), via rsqrt on squared norms (EUP)
            cos = dot * jax.lax.rsqrt(jnp.maximum(nc2 * nj2, eps2))  # (L, 1)

            # softmax over the sequence axis L (dim=1 of (B, L, K*K) in torch)
            m = jnp.max(cos, axis=0, keepdims=True)                  # (1, 1)
            e = jnp.exp(cos - m)                                     # (L, 1)
            denom = jnp.sum(e, axis=0, keepdims=True)                # (1, 1)
            adj_j = e * pl.reciprocal(denom, approx=True)            # (L, 1)

            y = y + adj_j * xj

        # single MXU matmul per batch element (bf16 inputs on v6e/v7x if requested)
        out = jnp.dot(y.astype(w.dtype), w, preferred_element_type=jnp.float32)
        out_ref[bi] = (out + bias).astype(out_ref.dtype)             # (L, Cp)


def _pick_batch_block(B, lp, fp, l, cp, budget_bytes=8 << 20):
    # largest divisor of B whose double-buffered f32 in+out blocks fit the budget
    per = 4 * 2 * (lp * fp + l * cp)
    bt = max(1, min(B, budget_bytes // max(per, 1)))
    while B % bt:
        bt -= 1
    return int(bt)


def drc_graph_conv(x, weight, bias, *, kernel_size=3, dilation=1, padding=1,
                   matmul_dtype=jnp.float32):
    """Forward of DRCGraphConvolution. x: (B, F, L) -> (B, C, L)."""
    B, F, L = x.shape
    Fin, C = weight.shape
    assert Fin == F
    # required for the unfold/reshape in the torch forward to be shape-consistent
    assert 2 * padding == dilation * (kernel_size - 1)
    K = kernel_size
    k_star = padding // dilation

    Fp = _round_up(F, 128)              # lane-dense feature axis
    Cp = _round_up(C, 128)              # lane-dense (unmasked vst) output axis
    Lp = L + 2 * padding                # sequence padding for the K taps

    # One transpose + pad instead of a K x-inflated unfold materialization.
    xt = jnp.transpose(x, (0, 2, 1)).astype(jnp.float32)             # (B, L, F)
    xp = jnp.pad(xt, ((0, 0), (padding, padding), (0, Fp - F)))      # (B, Lp, Fp)
    wp = jnp.pad(weight.astype(jnp.float32),
                 ((0, Fp - F), (0, Cp - C))).astype(matmul_dtype)    # (Fp, Cp)
    bp = jnp.pad(bias.astype(jnp.float32), (0, Cp - C)).reshape(1, Cp)

    Bt = _pick_batch_block(B, Lp, Fp, L, Cp)

    in_block = Bt * Lp * Fp * 4
    out_block = Bt * L * Cp * 4
    w_bytes = Fp * Cp * jnp.dtype(matmul_dtype).itemsize
    vmem_limit = int(min(96 << 20,
                         max(32 << 20,
                             2 * (in_block + out_block)
                             + 2 * (w_bytes + 4 * Cp) + (4 << 20))))

    kernel = functools.partial(_drc_kernel, K=K, k_star=k_star,
                               dilation=dilation, L=L)
    out = pl.pallas_call(
        kernel,
        out_shape=jax.ShapeDtypeStruct((B, L, Cp), jnp.float32),
        grid=(B // Bt,),
        in_specs=[
            pl.BlockSpec((Bt, Lp, Fp), lambda b: (b, 0, 0)),
            pl.BlockSpec((Fp, Cp), lambda b: (0, 0)),
            pl.BlockSpec((1, Cp), lambda b: (0, 0)),
        ],
        out_specs=pl.BlockSpec((Bt, L, Cp), lambda b: (b, 0, 0)),
        compiler_params=pltpu.CompilerParams(
            dimension_semantics=("parallel",),
            vmem_limit_bytes=vmem_limit),
    )(xp, wp, bp)

    # Slice off the C padding and return (B, C, L) as the torch module does.
    # TODO(synk): if the consumer can take (B, L, C), drop this transpose
    # (saves one extra HBM read+write of the output).
    return jnp.transpose(out[:, :, :C], (0, 2, 1))


# ----------------------------- pure-JAX reference -----------------------------

def _unfold_ref(x, K, dilation, padding):
    # torch F.unfold with kernel (K,1): inp[b,k,l,f] = x[b,f, l - padding + k*dilation]
    B, F, L = x.shape
    xp = jnp.pad(x, ((0, 0), (0, 0), (padding, padding)))
    cols = [jax.lax.slice_in_dim(xp, k * dilation, k * dilation + L, axis=2)
            for k in range(K)]
    inp = jnp.stack(cols, axis=1)              # (B, K, F, L)
    return jnp.transpose(inp, (0, 1, 3, 2))    # (B, K, L, F)


def _reference(x, weight, bias, K, dilation, padding):
    # Pure-JAX transcription of the full torch forward (incl. full KxK adj + fold).
    eps = 1e-8
    inp = _unfold_ref(x, K, dilation, padding)                    # (B, K, L, F)
    norms = jnp.sqrt(jnp.sum(inp * inp, axis=-1))                 # (B, K, L)
    dots = jnp.einsum('bilf,bjlf->blij', inp, inp)                # (B, L, K, K)
    n = jnp.transpose(norms, (0, 2, 1))                           # (B, L, K)
    cos = dots / jnp.maximum(n[:, :, :, None] * n[:, :, None, :], eps)
    adj = jax.nn.softmax(cos, axis=1)                             # softmax over L
    support = jnp.einsum('bklf,fc->blkc', inp, weight)            # (B, L, K, C)
    out = jnp.einsum('blij,bljc->blic', adj, support) + bias      # (B, L, K, C)
    k_star = padding // dilation                                  # fold keeps slot k*
    return jnp.transpose(out[:, :, k_star, :], (0, 2, 1))         # (B, C, L)


if __name__ == "__main__":
    B, F, L = 2, 32, 16
    K, DIL, PAD = 3, 1, 1
    C = F  # torch forward's reshape requires out_features == in_features

    key = jax.random.PRNGKey(0)
    kx, kw, kb = jax.random.split(key, 3)
    stdv = 1.0 / (C ** 0.5)
    x = jax.random.normal(kx, (B, F, L), dtype=jnp.float32)
    weight = jax.random.uniform(kw, (F, C), jnp.float32, -stdv, stdv)
    bias = jax.random.uniform(kb, (C,), jnp.float32, -stdv, stdv)

    ref = _reference(x, weight, bias, K, DIL, PAD)

    # f32 MXU path (tight-ish tolerance; approx reciprocal in the softmax)
    out_f32 = drc_graph_conv(x, weight, bias, kernel_size=K, dilation=DIL,
                             padding=PAD, matmul_dtype=jnp.float32)
    out_f32 = jax.block_until_ready(out_f32)
    assert out_f32.shape == (B, F, L)
    err32 = float(jnp.max(jnp.abs(out_f32 - ref)))
    assert jnp.allclose(out_f32, ref, rtol=5e-3, atol=5e-3), f"f32 max abs err {err32}"

    # bf16 MXU path (v6e / v7x recommendation), f32 accumulate, looser tolerance
    out_bf16 = drc_graph_conv(x, weight, bias, kernel_size=K, dilation=DIL,
                              padding=PAD, matmul_dtype=jnp.bfloat16)
    out_bf16 = jax.block_until_ready(out_bf16)
    errbf = float(jnp.max(jnp.abs(out_bf16 - ref)))
    assert jnp.allclose(out_bf16, ref, rtol=3e-2, atol=3e-2), f"bf16 max abs err {errbf}"

    print("KERNEL_OK")
</pallas_src>

<mosaic_0001>
module attributes {stable_mosaic.version = 11 : i64} {
  func.func @_drc_kernel(%arg0: i32, %arg1: memref<2x18x128xf32, #tpu.memory_space<vmem>>, %arg2: memref<128x128xf32, #tpu.memory_space<vmem>>, %arg3: memref<1x128xf32, #tpu.memory_space<vmem>>, %arg4: memref<2x16x128xf32, #tpu.memory_space<vmem>>) attributes {dimension_semantics = [#tpu.dimension_semantics<parallel>], iteration_bounds = array<i64: 1>, scalar_prefetch = 0 : i64, scratch_operands = 0 : i64, tpu.core_type = #tpu.core_type<tc>, window_params = [{transform_indices = @transform_0, window_bounds = array<i64: 2, 18, 128>}, {pipeline_mode = #tpu.pipeline_mode<synchronous>, transform_indices = @transform_1, window_bounds = array<i64: 128, 128>}, {pipeline_mode = #tpu.pipeline_mode<synchronous>, transform_indices = @transform_2, window_bounds = array<i64: 1, 128>}, {transform_indices = @transform_3, window_bounds = array<i64: 2, 16, 128>}]} {
    %c0 = arith.constant 0 : index
    %c0_0 = arith.constant 0 : index
    %0 = vector.load %arg2[%c0, %c0_0] : memref<128x128xf32, #tpu.memory_space<vmem>>, vector<128x128xf32>
    %c0_1 = arith.constant 0 : index
    %c0_2 = arith.constant 0 : index
    %1 = vector.load %arg3[%c0_1, %c0_2] : memref<1x128xf32, #tpu.memory_space<vmem>>, vector<1x128xf32>
    %c0_3 = arith.constant 0 : index
    %c1 = arith.constant 1 : index
    %c0_4 = arith.constant 0 : index
    %2 = vector.load %arg1[%c0_3, %c1, %c0_4] : memref<2x18x128xf32, #tpu.memory_space<vmem>>, vector<1x16x128xf32>
    %3 = vector.shape_cast %2 : vector<1x16x128xf32> to vector<16x128xf32>
    %4 = arith.mulf %3, %3 : vector<16x128xf32>
    %cst = arith.constant dense<0.000000e+00> : vector<16xf32>
    %5 = vector.multi_reduction <add>, %4, %cst [1] : vector<16x128xf32> to vector<16xf32>
    %6 = vector.shape_cast %5 : vector<16xf32> to vector<16x1xf32>
    %cst_5 = arith.constant 6.250000e-02 : f32
    %7 = vector.broadcast %cst_5 : f32 to vector<16x128xf32>
    %8 = arith.mulf %3, %7 : vector<16x128xf32>
    %c0_6 = arith.constant 0 : index
    %c0_7 = arith.constant 0 : index
    %c0_8 = arith.constant 0 : index
    %9 = vector.load %arg1[%c0_6, %c0_7, %c0_8] : memref<2x18x128xf32, #tpu.memory_space<vmem>>, vector<1x16x128xf32>
    %10 = vector.shape_cast %9 : vector<1x16x128xf32> to vector<16x128xf32>
    %11 = arith.mulf %10, %10 : vector<16x128xf32>
    %cst_9 = arith.constant dense<0.000000e+00> : vector<16xf32>
    %12 = vector.multi_reduction <add>, %11, %cst_9 [1] : vector<16x128xf32> to vector<16xf32>
    %13 = vector.shape_cast %12 : vector<16xf32> to vector<16x1xf32>
    %14 = arith.mulf %3, %10 : vector<16x128xf32>
    %cst_10 = arith.constant dense<0.000000e+00> : vector<16xf32>
    %15 = vector.multi_reduction <add>, %14, %cst_10 [1] : vector<16x128xf32> to vector<16xf32>
    %16 = vector.shape_cast %15 : vector<16xf32> to vector<16x1xf32>
    %17 = arith.mulf %6, %13 : vector<16x1xf32>
    %cst_11 = arith.constant 1.000000e-16 : f32
    %18 = vector.broadcast %cst_11 : f32 to vector<16x1xf32>
    %19 = arith.maximumf %17, %18 : vector<16x1xf32>
    %20 = math.rsqrt %19 : vector<16x1xf32>
    %21 = arith.mulf %16, %20 : vector<16x1xf32>
    %cst_12 = arith.constant dense<0xFF800000> : vector<1xf32>
    %22 = vector.multi_reduction <maximumf>, %21, %cst_12 [0] : vector<16x1xf32> to vector<1xf32>
    %23 = vector.shape_cast %22 : vector<1xf32> to vector<1x1xf32>
    %24 = vector.broadcast %23 : vector<1x1xf32> to vector<16x1xf32>
    %25 = arith.subf %21, %24 : vector<16x1xf32>
    %26 = math.exp %25 : vector<16x1xf32>
    %cst_13 = arith.constant dense<0.000000e+00> : vector<1xf32>
    %27 = vector.multi_reduction <add>, %26, %cst_13 [0] : vector<16x1xf32> to vector<1xf32>
    %28 = vector.shape_cast %27 : vector<1xf32> to vector<1x1xf32>
    %29 = tpu.reciprocal %28 {approx = true} : vector<1x1xf32> -> vector<1x1xf32>
    %30 = vector.broadcast %29 : vector<1x1xf32> to vector<16x1xf32>
    %31 = arith.mulf %26, %30 : vector<16x1xf32>
    %32 = vector.broadcast %31 : vector<16x1xf32> to vector<16x128xf32>
    %33 = arith.mulf %32, %10 : vector<16x128xf32>
    %34 = arith.addf %8, %33 : vector<16x128xf32>
    %c0_14 = arith.constant 0 : index
    %c2 = arith.constant 2 : index
    %c0_15 = arith.constant 0 : index
    %35 = vector.load %arg1[%c0_14, %c2, %c0_15] : memref<2x18x128xf32, #tpu.memory_space<vmem>>, vector<1x16x128xf32>
    %36 = vector.shape_cast %35 : vector<1x16x128xf32> to vector<16x128xf32>
    %37 = arith.mulf %36, %36 : vector<16x128xf32>
    %cst_16 = arith.constant dense<0.000000e+00> : vector<16xf32>
    %38 = vector.multi_reduction <add>, %37, %cst_16 [1] : vector<16x128xf32> to vector<16xf32>
    %39 = vector.shape_cast %38 : vector<16xf32> to vector<16x1xf32>
    %40 = arith.mulf %3, %36 : vector<16x128xf32>
    %cst_17 = arith.constant dense<0.000000e+00> : vector<16xf32>
    %41 = vector.multi_reduction <add>, %40, %cst_17 [1] : vector<16x128xf32> to vector<16xf32>
    %42 = vector.shape_cast %41 : vector<16xf32> to vector<16x1xf32>
    %43 = arith.mulf %6, %39 : vector<16x1xf32>
    %cst_18 = arith.constant 1.000000e-16 : f32
    %44 = vector.broadcast %cst_18 : f32 to vector<16x1xf32>
    %45 = arith.maximumf %43, %44 : vector<16x1xf32>
    %46 = math.rsqrt %45 : vector<16x1xf32>
    %47 = arith.mulf %42, %46 : vector<16x1xf32>
    %cst_19 = arith.constant dense<0xFF800000> : vector<1xf32>
    %48 = vector.multi_reduction <maximumf>, %47, %cst_19 [0] : vector<16x1xf32> to vector<1xf32>
    %49 = vector.shape_cast %48 : vector<1xf32> to vector<1x1xf32>
    %50 = vector.broadcast %49 : vector<1x1xf32> to vector<16x1xf32>
    %51 = arith.subf %47, %50 : vector<16x1xf32>
    %52 = math.exp %51 : vector<16x1xf32>
    %cst_20 = arith.constant dense<0.000000e+00> : vector<1xf32>
    %53 = vector.multi_reduction <add>, %52, %cst_20 [0] : vector<16x1xf32> to vector<1xf32>
    %54 = vector.shape_cast %53 : vector<1xf32> to vector<1x1xf32>
    %55 = tpu.reciprocal %54 {approx = true} : vector<1x1xf32> -> vector<1x1xf32>
    %56 = vector.broadcast %55 : vector<1x1xf32> to vector<16x1xf32>
    %57 = arith.mulf %52, %56 : vector<16x1xf32>
    %58 = vector.broadcast %57 : vector<16x1xf32> to vector<16x128xf32>
    %59 = arith.mulf %58, %36 : vector<16x128xf32>
    %60 = arith.addf %34, %59 : vector<16x128xf32>
    %cst_21 = arith.constant dense<0.000000e+00> : vector<16x128xf32>
    %61 = tpu.matmul %60, %0, %cst_21 {dimension_numbers = #tpu.dot_dimension_numbers<[1], [0], [0], [1], [0, 0, 1, 1], [], []>} : vector<16x128xf32>, vector<128x128xf32>, vector<16x128xf32> -> vector<16x128xf32>
    %62 = vector.broadcast %1 : vector<1x128xf32> to vector<16x128xf32>
    %63 = arith.addf %61, %62 : vector<16x128xf32>
    %c0_22 = arith.constant 0 : index
    %c0_23 = arith.constant 0 : index
    %c0_24 = arith.constant 0 : index
    %64 = vector.load %arg4[%c0_22, %c0_23, %c0_24] : memref<2x16x128xf32, #tpu.memory_space<vmem>>, vector<1x16x128xf32>
    %65 = vector.shape_cast %64 : vector<1x16x128xf32> to vector<16x128xf32>
    %66 = vector.shape_cast %63 : vector<16x128xf32> to vector<1x16x128xf32>
    tpu.vector_store %arg4[%c0_22, %c0_23, %c0_24], %66 {strides = array<i32>} : memref<2x16x128xf32, #tpu.memory_space<vmem>>, vector<1x16x128xf32>,
    %c1_25 = arith.constant 1 : index
    %c1_26 = arith.constant 1 : index
    %c0_27 = arith.constant 0 : index
    %67 = vector.load %arg1[%c1_25, %c1_26, %c0_27] : memref<2x18x128xf32, #tpu.memory_space<vmem>>, vector<1x16x128xf32>
    %68 = vector.shape_cast %67 : vector<1x16x128xf32> to vector<16x128xf32>
    %69 = arith.mulf %68, %68 : vector<16x128xf32>
    %cst_28 = arith.constant dense<0.000000e+00> : vector<16xf32>
    %70 = vector.multi_reduction <add>, %69, %cst_28 [1] : vector<16x128xf32> to vector<16xf32>
    %71 = vector.shape_cast %70 : vector<16xf32> to vector<16x1xf32>
    %cst_29 = arith.constant 6.250000e-02 : f32
    %72 = vector.broadcast %cst_29 : f32 to vector<16x128xf32>
    %73 = arith.mulf %68, %72 : vector<16x128xf32>
    %c1_30 = arith.constant 1 : index
    %c0_31 = arith.constant 0 : index
    %c0_32 = arith.constant 0 : index
    %74 = vector.load %arg1[%c1_30, %c0_31, %c0_32] : memref<2x18x128xf32, #tpu.memory_space<vmem>>, vector<1x16x128xf32>
    %75 = vector.shape_cast %74 : vector<1x16x128xf32> to vector<16x128xf32>
    %76 = arith.mulf %75, %75 : vector<16x128xf32>
    %cst_33 = arith.constant dense<0.000000e+00> : vector<16xf32>
    %77 = vector.multi_reduction <add>, %76, %cst_33 [1] : vector<16x128xf32> to vector<16xf32>
    %78 = vector.shape_cast %77 : vector<16xf32> to vector<16x1xf32>
    %79 = arith.mulf %68, %75 : vector<16x128xf32>
    %cst_34 = arith.constant dense<0.000000e+00> : vector<16xf32>
    %80 = vector.multi_reduction <add>, %79, %cst_34 [1] : vector<16x128xf32> to vector<16xf32>
    %81 = vector.shape_cast %80 : vector<16xf32> to vector<16x1xf32>
    %82 = arith.mulf %71, %78 : vector<16x1xf32>
    %cst_35 = arith.constant 1.000000e-16 : f32
    %83 = vector.broadcast %cst_35 : f32 to vector<16x1xf32>
    %84 = arith.maximumf %82, %83 : vector<16x1xf32>
    %85 = math.rsqrt %84 : vector<16x1xf32>
    %86 = arith.mulf %81, %85 : vector<16x1xf32>
    %cst_36 = arith.constant dense<0xFF800000> : vector<1xf32>
    %87 = vector.multi_reduction <maximumf>, %86, %cst_36 [0] : vector<16x1xf32> to vector<1xf32>
    %88 = vector.shape_cast %87 : vector<1xf32> to vector<1x1xf32>
    %89 = vector.broadcast %88 : vector<1x1xf32> to vector<16x1xf32>
    %90 = arith.subf %86, %89 : vector<16x1xf32>
    %91 = math.exp %90 : vector<16x1xf32>
    %cst_37 = arith.constant dense<0.000000e+00> : vector<1xf32>
    %92 = vector.multi_reduction <add>, %91, %cst_37 [0] : vector<16x1xf32> to vector<1xf32>
    %93 = vector.shape_cast %92 : vector<1xf32> to vector<1x1xf32>
    %94 = tpu.reciprocal %93 {approx = true} : vector<1x1xf32> -> vector<1x1xf32>
    %95 = vector.broadcast %94 : vector<1x1xf32> to vector<16x1xf32>
    %96 = arith.mulf %91, %95 : vector<16x1xf32>
    %97 = vector.broadcast %96 : vector<16x1xf32> to vector<16x128xf32>
    %98 = arith.mulf %97, %75 : vector<16x128xf32>
    %99 = arith.addf %73, %98 : vector<16x128xf32>
    %c1_38 = arith.constant 1 : index
    %c2_39 = arith.constant 2 : index
    %c0_40 = arith.constant 0 : index
    %100 = vector.load %arg1[%c1_38, %c2_39, %c0_40] : memref<2x18x128xf32, #tpu.memory_space<vmem>>, vector<1x16x128xf32>
    %101 = vector.shape_cast %100 : vector<1x16x128xf32> to vector<16x128xf32>
    %102 = arith.mulf %101, %101 : vector<16x128xf32>
    %cst_41 = arith.constant dense<0.000000e+00> : vector<16xf32>
    %103 = vector.multi_reduction <add>, %102, %cst_41 [1] : vector<16x128xf32> to vector<16xf32>
    %104 = vector.shape_cast %103 : vector<16xf32> to vector<16x1xf32>
    %105 = arith.mulf %68, %101 : vector<16x128xf32>
    %cst_42 = arith.constant dense<0.000000e+00> : vector<16xf32>
    %106 = vector.multi_reduction <add>, %105, %cst_42 [1] : vector<16x128xf32> to vector<16xf32>
    %107 = vector.shape_cast %106 : vector<16xf32> to vector<16x1xf32>
    %108 = arith.mulf %71, %104 : vector<16x1xf32>
    %cst_43 = arith.constant 1.000000e-16 : f32
    %109 = vector.broadcast %cst_43 : f32 to vector<16x1xf32>
    %110 = arith.maximumf %108, %109 : vector<16x1xf32>
    %111 = math.rsqrt %110 : vector<16x1xf32>
    %112 = arith.mulf %107, %111 : vector<16x1xf32>
    %cst_44 = arith.constant dense<0xFF800000> : vector<1xf32>
    %113 = vector.multi_reduction <maximumf>, %112, %cst_44 [0] : vector<16x1xf32> to vector<1xf32>
    %114 = vector.shape_cast %113 : vector<1xf32> to vector<1x1xf32>
    %115 = vector.broadcast %114 : vector<1x1xf32> to vector<16x1xf32>
    %116 = arith.subf %112, %115 : vector<16x1xf32>
    %117 = math.exp %116 : vector<16x1xf32>
    %cst_45 = arith.constant dense<0.000000e+00> : vector<1xf32>
    %118 = vector.multi_reduction <add>, %117, %cst_45 [0] : vector<16x1xf32> to vector<1xf32>
    %119 = vector.shape_cast %118 : vector<1xf32> to vector<1x1xf32>
    %120 = tpu.reciprocal %119 {approx = true} : vector<1x1xf32> -> vector<1x1xf32>
    %121 = vector.broadcast %120 : vector<1x1xf32> to vector<16x1xf32>
    %122 = arith.mulf %117, %121 : vector<16x1xf32>
    %123 = vector.broadcast %122 : vector<16x1xf32> to vector<16x128xf32>
    %124 = arith.mulf %123, %101 : vector<16x128xf32>
    %125 = arith.addf %99, %124 : vector<16x128xf32>
    %cst_46 = arith.constant dense<0.000000e+00> : vector<16x128xf32>
    %126 = tpu.matmul %125, %0, %cst_46 {dimension_numbers = #tpu.dot_dimension_numbers<[1], [0], [0], [1], [0, 0, 1, 1], [], []>} : vector<16x128xf32>, vector<128x128xf32>, vector<16x128xf32> -> vector<16x128xf32>
    %127 = vector.broadcast %1 : vector<1x128xf32> to vector<16x128xf32>
    %128 = arith.addf %126, %127 : vector<16x128xf32>
    %c1_47 = arith.constant 1 : index
    %c0_48 = arith.constant 0 : index
    %c0_49 = arith.constant 0 : index
    %129 = vector.load %arg4[%c1_47, %c0_48, %c0_49] : memref<2x16x128xf32, #tpu.memory_space<vmem>>, vector<1x16x128xf32>
    %130 = vector.shape_cast %129 : vector<1x16x128xf32> to vector<16x128xf32>
    %131 = vector.shape_cast %128 : vector<16x128xf32> to vector<1x16x128xf32>
    tpu.vector_store %arg4[%c1_47, %c0_48, %c0_49], %131 {strides = array<i32>} : memref<2x16x128xf32, #tpu.memory_space<vmem>>, vector<1x16x128xf32>,
    return
  }
  func.func @transform_0(%arg0: i32) -> (i32, i32, i32) {
    %c0_i32 = arith.constant 0 : i32
    %c0_i32_0 = arith.constant 0 : i32
    %c0_i32_1 = arith.constant 0 : i32
    return %arg0, %c0_i32, %c0_i32_0 : i32, i32, i32
  }
  func.func @transform_1(%arg0: i32) -> (i32, i32) {
    %c0_i32 = arith.constant 0 : i32
    %c0_i32_0 = arith.constant 0 : i32
    %c0_i32_1 = arith.constant 0 : i32
    return %c0_i32, %c0_i32_0 : i32, i32
  }
  func.func @transform_2(%arg0: i32) -> (i32, i32) {
    %c0_i32 = arith.constant 0 : i32
    %c0_i32_0 = arith.constant 0 : i32
    %c0_i32_1 = arith.constant 0 : i32
    return %c0_i32, %c0_i32_0 : i32, i32
  }
  func.func @transform_3(%arg0: i32) -> (i32, i32, i32) {
    %c0_i32 = arith.constant 0 : i32
    %c0_i32_0 = arith.constant 0 : i32
    %c0_i32_1 = arith.constant 0 : i32
    return %arg0, %c0_i32, %c0_i32_0 : i32, i32, i32
  }
}

</mosaic_0001>

<llo_original>
// kernel: tpu_custom_call.1
$region0: #{tpu_custom_call.1}
  #allocation0 [shape = 'u32[]', space=smem, size = 0x4, offset = 0x4, fixed_abs, tag = 'smem constant byte address 0x4 - core index']
  #allocation1 [shape = 'u32[72,128]{1,0:T(1,128)}', space=vmem, size = 0x9000, scoped, tag = 'internal scratch']
  %s0 = inlined_call_operand.vmem [shape: f32[2,18,128], index: 0, kind: input, shape index: {}]
  %s1 = inlined_call_operand.hbm [shape: f32[128,128], index: 1, kind: input, shape index: {}]
  %s2 = inlined_call_operand.vmem [shape: f32[1,128], index: 2, kind: input, shape index: {}]
  %s3 = inlined_call_operand.hbm [shape: f32[2,16,128], index: 3, kind: output, shape index: {}]
  %s4 = sld [smem:[#allocation0]]
  $region26: #{tpu_custom_call.1} parent=0
    _
  %s6 = ssub.s32 1, %s4
  %s7 = scalar_select 0, %s6, %s4
  $region1: #{tpu_custom_call.1} parent=0
    #allocation2 [shape = 'u8[65536]{0}', space=vmem, size = 0x10000, scoped, tag = 'input window, operand 1, single buffered']
    #allocation3 [shape = 's32[1]{0}', space=sflag, size = 0x4, scoped, tag = 'scoped memory for tpu_custom_call.1']
    #allocation4 [shape = 's32[1]{0}', space=sflag, size = 0x4, scoped, tag = 'scoped memory for tpu_custom_call.1']
    #allocation5 [shape = 'u8[16384]{0}', space=vmem, size = 0x4000, scoped, tag = 'output window, operand 0, single buffered']
    %8 = vsyncpa [#allocation3], 0
    %9 = vsyncpa [#allocation4], 0
    // Predicated region
    $region2: #{tpu_custom_call.1} parent=1 // pred_check
      _
    $region3: #{tpu_custom_call.1} parent=1 // pred_check_branch
      %11 = sbr.rel (0) target = $region5
    $region4: #{tpu_custom_call.1} parent=1 // pred_region
      _
    $region5: #{tpu_custom_call.1} parent=1 // pred_fallthru
      _
    // Predicated region
    $region6: #{tpu_custom_call.1} parent=1 // pred_check
      _
    $region7: #{tpu_custom_call.1} parent=1 // pred_check_branch
      %13 = sbr.rel (0) target = $region9
    $region8: #{tpu_custom_call.1} parent=1 // pred_region
      %15 = vsyncadd [#allocation3], 0
      %s16 = sshll.u32 %s1, 4
      %s17 = int_to_ptr.hbm [resolvable:$true] %s16
      %s18 = sshll.u32 [#allocation2], 4
      %s19 = int_to_ptr.vmem [resolvable:$true] %s18
      %24 = dma.hbm_to_vmem [thread:$0]  %s17, 2048, %s19, [#allocation3], 128, 128, 8
    $region9: #{tpu_custom_call.1} parent=1 // pred_fallthru
      _
    // Predicated region
    $region10: #{tpu_custom_call.1} parent=1 // pred_check
      _
    $region11: #{tpu_custom_call.1} parent=1 // pred_check_branch
      %26 = sbr.rel (0) target = $region13
    $region12: #{tpu_custom_call.1} parent=1 // pred_region
      _
    $region13: #{tpu_custom_call.1} parent=1 // pred_fallthru
      _
    // Predicated region
    $region14: #{tpu_custom_call.1} parent=1 // pred_check
      _
    $region15: #{tpu_custom_call.1} parent=1 // pred_check_branch
      %28 = sbr.rel (0) target = $region17
    $region16: #{tpu_custom_call.1} parent=1 // pred_region
      %30 = dma.done [#allocation3], 2048
    $region17: #{tpu_custom_call.1} parent=1 // pred_fallthru
      _
    %v31 = vld [vmem:[#allocation2] sm:$0xff]
    %v32 = vld [vmem:[#allocation2 + $0x8] sm:$0xff]
    %v33 = vld [vmem:[#allocation2 + $0x10] sm:$0xff]
    %v34 = vld [vmem:[#allocation2 + $0x18] sm:$0xff]
    %v35 = vld [vmem:[#allocation2 + $0x20] sm:$0xff]
    %v36 = vld [vmem:[#allocation2 + $0x28] sm:$0xff]
    %v37 = vld [vmem:[#allocation2 + $0x30] sm:$0xff]
    %v38 = vld [vmem:[#allocation2 + $0x38] sm:$0xff]
    %v39 = vld [vmem:[#allocation2 + $0x40] sm:$0xff]
    %v40 = vld [vmem:[#allocation2 + $0x48] sm:$0xff]
    %v41 = vld [vmem:[#allocation2 + $0x50] sm:$0xff]
    %v42 = vld [vmem:[#allocation2 + $0x58] sm:$0xff]
    %v43 = vld [vmem:[#allocation2 + $0x60] sm:$0xff]
    %v44 = vld [vmem:[#allocation2 + $0x68] sm:$0xff]
    %v45 = vld [vmem:[#allocation2 + $0x70] sm:$0xff]
    %v46 = vld [vmem:[#allocation2 + $0x78] sm:$0xff]
    %v47 = vld [vmem:[%s2] sm:$0x1]
    %v48 = vld [vmem:[%s0 + $0x1] sm:$0xff]
    %v49 = vld [vmem:[%s0 + $0x9] sm:$0xff]
    %v50 = vmul.f32 %v48, %v48
    %v51 = vmul.f32 %v49, %v49
    %52 = vadd.xlane.f32.xlu0 %v50
    %v53 = vpop.xlane.xlu0 %52
    %54 = vadd.xlane.f32.xlu0 %v51
    %v55 = vpop.xlane.xlu0 %54
    %v56 = vmul.f32 %v48, 0.0625
    %v57 = vmul.f32 %v49, 0.0625
    %v58 = vld [vmem:[%s0] sm:$0xff]
    %v59 = vld [vmem:[%s0 + $0x8] sm:$0xff]
    %v60 = vmul.f32 %v58, %v58
    %v61 = vmul.f32 %v59, %v59
    %62 = vadd.xlane.f32.xlu0 %v60
    %v63 = vpop.xlane.xlu0 %62
    %64 = vadd.xlane.f32.xlu0 %v61
    %v65 = vpop.xlane.xlu0 %64
    %v66 = vmul.f32 %v48, %v58
    %v67 = vmul.f32 %v49, %v59
    %68 = vadd.xlane.f32.xlu0 %v66
    %v69 = vpop.xlane.xlu0 %68
    %70 = vadd.xlane.f32.xlu0 %v67
    %v71 = vpop.xlane.xlu0 %70
    %v72 = vmul.f32 %v53, %v63
    %v73 = vmul.f32 %v55, %v65
    %v74 = vmax.f32 %v72, 1e-16
    %v75 = vmax.f32 %v73, 1e-16
    %v76 = vrsqrt.pop %v74
    %v77 = vmul.f32 %v76, %v74
    %v78 = vmul.f32 %v77, %v76
    %v79 = vmul.f32 0.5, %v78
    %v80 = vsub.f32 1.5, %v79
    %v81 = vmul.f32 %v76, %v80
    %vm82 = vweird.f32 %v74
    %vm83 = vweird.f32 %v76
    %vm84 = vmor %vm82, %vm83
    %v85 = vsel %vm84, %v76, %v81
    %v86 = vrsqrt.pop %v75
    %v87 = vmul.f32 %v86, %v75
    %v88 = vmul.f32 %v87, %v86
    %v89 = vmul.f32 0.5, %v88
    %v90 = vsub.f32 1.5, %v89
    %v91 = vmul.f32 %v86, %v90
    %vm92 = vweird.f32 %v75
    %vm93 = vweird.f32 %v86
    %vm94 = vmor %vm92, %vm93
    %v95 = vsel %vm94, %v86, %v91
    %v96 = vmul.f32 %v69, %v85
    %v97 = vmul.f32 %v71, %v95
    %v98 = vmax.f32 %v96, %v97
    %v99 = vrot.slane %v98, 4
    %v100 = vmax.f32 %v98, %v99
    %v101 = vrot.slane %v100, 2
    %v102 = vmax.f32 %v100, %v101
    %v103 = vrot.slane %v102, 1
    %v104 = vmax.f32 %v102, %v103
    %v105 = vsub.f32 %v96, %v104
    %v106 = vsub.f32 %v97, %v104
    %v107 = vmul.f32 %v105, 1.442695
    %v108 = vpow.pop %v107
    %v109 = vmul.f32 %v106, 1.442695
    %v110 = vpow.pop %v109
    %v111 = vadd.f32 %v108, %v110
    %v112 = vrot.slane %v111, 4
    %v113 = vadd.f32 %v111, %v112
    %v114 = vrot.slane %v113, 2
    %v115 = vadd.f32 %v113, %v114
    %v116 = vrot.slane %v115, 1
    %v117 = vadd.f32 %v115, %v116
    %v118 = vrcp.pop %v117
    %v119 = vmul.f32 %v108, %v118
    %v120 = vmul.f32 %v110, %v118
    %v121 = vmul.f32 %v119, %v58
    %v122 = vmul.f32 %v120, %v59
    %v123 = vadd.f32 %v56, %v121
    %v124 = vadd.f32 %v57, %v122
    %v125 = vld [vmem:[%s0 + $0x2] sm:$0xff]
    %v126 = vld [vmem:[%s0 + $0xa] sm:$0xff]
    %v127 = vmul.f32 %v125, %v125
    %v128 = vmul.f32 %v126, %v126
    %129 = vadd.xlane.f32.xlu0 %v127
    %v130 = vpop.xlane.xlu0 %129
    %131 = vadd.xlane.f32.xlu0 %v128
    %v132 = vpop.xlane.xlu0 %131
    %v133 = vmul.f32 %v48, %v125
    %v134 = vmul.f32 %v49, %v126
    %135 = vadd.xlane.f32.xlu0 %v133
    %v136 = vpop.xlane.xlu0 %135
    %137 = vadd.xlane.f32.xlu0 %v134
    %v138 = vpop.xlane.xlu0 %137
    %v139 = vmul.f32 %v53, %v130
    %v140 = vmul.f32 %v55, %v132
    %v141 = vmax.f32 %v139, 1e-16
    %v142 = vmax.f32 %v140, 1e-16
    %v143 = vrsqrt.pop %v141
    %v144 = vmul.f32 %v143, %v141
    %v145 = vmul.f32 %v144, %v143
    %v146 = vmul.f32 0.5, %v145
    %v147 = vsub.f32 1.5, %v146
    %v148 = vmul.f32 %v143, %v147
    %vm149 = vweird.f32 %v141
    %vm150 = vweird.f32 %v143
    %vm151 = vmor %vm149, %vm150
    %v152 = vsel %vm151, %v143, %v148
    %v153 = vrsqrt.pop %v142
    %v154 = vmul.f32 %v153, %v142
    %v155 = vmul.f32 %v154, %v153
    %v156 = vmul.f32 0.5, %v155
    %v157 = vsub.f32 1.5, %v156
    %v158 = vmul.f32 %v153, %v157
    %vm159 = vweird.f32 %v142
    %vm160 = vweird.f32 %v153
    %vm161 = vmor %vm159, %vm160
    %v162 = vsel %vm161, %v153, %v158
    %v163 = vmul.f32 %v136, %v152
    %v164 = vmul.f32 %v138, %v162
    %v165 = vmax.f32 %v163, %v164
    %v166 = vrot.slane %v165, 4
    %v167 = vmax.f32 %v165, %v166
    %v168 = vrot.slane %v167, 2
    %v169 = vmax.f32 %v167, %v168
    %v170 = vrot.slane %v169, 1
    %v171 = vmax.f32 %v169, %v170
    %v172 = vsub.f32 %v163, %v171
    %v173 = vsub.f32 %v164, %v171
    %v174 = vmul.f32 %v172, 1.442695
    %v175 = vpow.pop %v174
    %v176 = vmul.f32 %v173, 1.442695
    %v177 = vpow.pop %v176
    %v178 = vadd.f32 %v175, %v177
    %v179 = vrot.slane %v178, 4
    %v180 = vadd.f32 %v178, %v179
    %v181 = vrot.slane %v180, 2
    %v182 = vadd.f32 %v180, %v181
    %v183 = vrot.slane %v182, 1
    %v184 = vadd.f32 %v182, %v183
    %v185 = vrcp.pop %v184
    %v186 = vmul.f32 %v175, %v185
    %v187 = vmul.f32 %v177, %v185
    %v188 = vmul.f32 %v186, %v125
    %v189 = vmul.f32 %v187, %v126
    %v190 = vadd.f32 %v123, %v188
    %v191 = vadd.f32 %v124, %v189
    %v193 = vperm.slane %v47, 0
    %195 = vmatpush.msra.mxu0 %v46
    %196 = vmatpush.msra.mxu0 %v45
    %197 = vmatpush.msra.mxu0 %v44
    %198 = vmatpush.msra.mxu0 %v43
    %199 = vmatpush.msra.mxu0 %v42
    %200 = vmatpush.msra.mxu0 %v41
    %201 = vmatpush.msra.mxu0 %v40
    %202 = vmatpush.msra.mxu0 %v39
    %203 = vmatpush.msra.mxu0 %v38
    %204 = vmatpush.msra.mxu0 %v37
    %205 = vmatpush.msra.mxu0 %v36
    %206 = vmatpush.msra.mxu0 %v35
    %207 = vmatpush.msra.mxu0 %v34
    %208 = vmatpush.msra.mxu0 %v33
    %209 = vmatpush.msra.mxu0 %v32
    %210 = vmatpush.msra.mxu0 %v31
    %211 = vmatmul.f32.gmra.mxu0 %v190
    %v212 = vpop.f32.mrf.mxu0
    %v213 = vadd.f32 %v193, %v212
    %214 = vmatmul.f32.gmra.mxu0 %v191
    %v215 = vpop.f32.mrf.mxu0
    %v216 = vadd.f32 %v193, %v215
    %217 = vdwg.mxu0
    %218 = vst [vmem:[#allocation5] sm:$0xff] %v213
    %219 = vst [vmem:[#allocation5 + $0x8] sm:$0xff] %v216
    %s220 = scalar_lea.vmem %s0, 24
    %v221 = vld [vmem:[%s220 + $0x1] sm:$0xff]
    %v222 = vld [vmem:[%s220 + $0x9] sm:$0xff]
    %v223 = vmul.f32 %v221, %v221
    %v224 = vmul.f32 %v222, %v222
    %225 = vadd.xlane.f32.xlu0 %v223
    %v226 = vpop.xlane.xlu0 %225
    %227 = vadd.xlane.f32.xlu0 %v224
    %v228 = vpop.xlane.xlu0 %227
    %v229 = vmul.f32 %v221, 0.0625
    %v230 = vmul.f32 %v222, 0.0625
    %v231 = vld [vmem:[%s220] sm:$0xff]
    %v232 = vld [vmem:[%s220 + $0x8] sm:$0xff]
    %v233 = vmul.f32 %v231, %v231
    %v234 = vmul.f32 %v232, %v232
    %235 = vadd.xlane.f32.xlu0 %v233
    %v236 = vpop.xlane.xlu0 %235
    %237 = vadd.xlane.f32.xlu0 %v234
    %v238 = vpop.xlane.xlu0 %237
    %v239 = vmul.f32 %v221, %v231
    %v240 = vmul.f32 %v222, %v232
    %241 = vadd.xlane.f32.xlu0 %v239
    %v242 = vpop.xlane.xlu0 %241
    %243 = vadd.xlane.f32.xlu0 %v240
    %v244 = vpop.xlane.xlu0 %243
    %v245 = vmul.f32 %v226, %v236
    %v246 = vmul.f32 %v228, %v238
    %v247 = vmax.f32 %v245, 1e-16
    %v248 = vmax.f32 %v246, 1e-16
    %v249 = vrsqrt.pop %v247
    %v250 = vmul.f32 %v249, %v247
    %v251 = vmul.f32 %v250, %v249
    %v252 = vmul.f32 0.5, %v251
    %v253 = vsub.f32 1.5, %v252
    %v254 = vmul.f32 %v249, %v253
    %vm255 = vweird.f32 %v247
    %vm256 = vweird.f32 %v249
    %vm257 = vmor %vm255, %vm256
    %v258 = vsel %vm257, %v249, %v254
    %v259 = vrsqrt.pop %v248
    %v260 = vmul.f32 %v259, %v248
    %v261 = vmul.f32 %v260, %v259
    %v262 = vmul.f32 0.5, %v261
    %v263 = vsub.f32 1.5, %v262
    %v264 = vmul.f32 %v259, %v263
    %vm265 = vweird.f32 %v248
    %vm266 = vweird.f32 %v259
    %vm267 = vmor %vm265, %vm266
    %v268 = vsel %vm267, %v259, %v264
    %v269 = vmul.f32 %v242, %v258
    %v270 = vmul.f32 %v244, %v268
    %v271 = vmax.f32 %v269, %v270
    %v272 = vrot.slane %v271, 4
    %v273 = vmax.f32 %v271, %v272
    %v274 = vrot.slane %v273, 2
    %v275 = vmax.f32 %v273, %v274
    %v276 = vrot.slane %v275, 1
    %v277 = vmax.f32 %v275, %v276
    %v278 = vsub.f32 %v269, %v277
    %v279 = vsub.f32 %v270, %v277
    %v280 = vmul.f32 %v278, 1.442695
    %v281 = vpow.pop %v280
    %v282 = vmul.f32 %v279, 1.442695
    %v283 = vpow.pop %v282
    %v284 = vadd.f32 %v281, %v283
    %v285 = vrot.slane %v284, 4
    %v286 = vadd.f32 %v284, %v285
    %v287 = vrot.slane %v286, 2
    %v288 = vadd.f32 %v286, %v287
    %v289 = vrot.slane %v288, 1
    %v290 = vadd.f32 %v288, %v289
    %v291 = vrcp.pop %v290
    %v292 = vmul.f32 %v281, %v291
    %v293 = vmul.f32 %v283, %v291
    %v294 = vmul.f32 %v292, %v231
    %v295 = vmul.f32 %v293, %v232
    %v296 = vadd.f32 %v229, %v294
    %v297 = vadd.f32 %v230, %v295
    %v298 = vld [vmem:[%s220 + $0x2] sm:$0xff]
    %v299 = vld [vmem:[%s220 + $0xa] sm:$0xff]
    %v300 = vmul.f32 %v298, %v298
    %v301 = vmul.f32 %v299, %v299
    %302 = vadd.xlane.f32.xlu0 %v300
    %v303 = vpop.xlane.xlu0 %302
    %304 = vadd.xlane.f32.xlu0 %v301
    %v305 = vpop.xlane.xlu0 %304
    %v306 = vmul.f32 %v221, %v298
    %v307 = vmul.f32 %v222, %v299
    %308 = vadd.xlane.f32.xlu0 %v306
    %v309 = vpop.xlane.xlu0 %308
    %310 = vadd.xlane.f32.xlu0 %v307
    %v311 = vpop.xlane.xlu0 %310
    %v312 = vmul.f32 %v226, %v303
    %v313 = vmul.f32 %v228, %v305
    %v314 = vmax.f32 %v312, 1e-16
    %v315 = vmax.f32 %v313, 1e-16
    %v316 = vrsqrt.pop %v314
    %v317 = vmul.f32 %v316, %v314
    %v318 = vmul.f32 %v317, %v316
    %v319 = vmul.f32 0.5, %v318
    %v320 = vsub.f32 1.5, %v319
    %v321 = vmul.f32 %v316, %v320
    %vm322 = vweird.f32 %v314
    %vm323 = vweird.f32 %v316
    %vm324 = vmor %vm322, %vm323
    %v325 = vsel %vm324, %v316, %v321
    %v326 = vrsqrt.pop %v315
    %v327 = vmul.f32 %v326, %v315
    %v328 = vmul.f32 %v327, %v326
    %v329 = vmul.f32 0.5, %v328
    %v330 = vsub.f32 1.5, %v329
    %v331 = vmul.f32 %v326, %v330
    %vm332 = vweird.f32 %v315
    %vm333 = vweird.f32 %v326
    %vm334 = vmor %vm332, %vm333
    %v335 = vsel %vm334, %v326, %v331
    %v336 = vmul.f32 %v309, %v325
    %v337 = vmul.f32 %v311, %v335
    %v338 = vmax.f32 %v336, %v337
    %v339 = vrot.slane %v338, 4
    %v340 = vmax.f32 %v338, %v339
    %v341 = vrot.slane %v340, 2
    %v342 = vmax.f32 %v340, %v341
    %v343 = vrot.slane %v342, 1
    %v344 = vmax.f32 %v342, %v343
    %v345 = vsub.f32 %v336, %v344
    %v346 = vsub.f32 %v337, %v344
    %v347 = vmul.f32 %v345, 1.442695
    %v348 = vpow.pop %v347
    %v349 = vmul.f32 %v346, 1.442695
    %v350 = vpow.pop %v349
    %v351 = vadd.f32 %v348, %v350
    %v352 = vrot.slane %v351, 4
    %v353 = vadd.f32 %v351, %v352
    %v354 = vrot.slane %v353, 2
    %v355 = vadd.f32 %v353, %v354
    %v356 = vrot.slane %v355, 1
    %v357 = vadd.f32 %v355, %v356
    %v358 = vrcp.pop %v357
    %v359 = vmul.f32 %v348, %v358
    %v360 = vmul.f32 %v350, %v358
    %v361 = vmul.f32 %v359, %v298
    %v362 = vmul.f32 %v360, %v299
    %v363 = vadd.f32 %v296, %v361
    %v364 = vadd.f32 %v297, %v362
    %365 = vmatpush.msra.mxu0 %v46
    %366 = vmatpush.msra.mxu0 %v45
    %367 = vmatpush.msra.mxu0 %v44
    %368 = vmatpush.msra.mxu0 %v43
    %369 = vmatpush.msra.mxu0 %v42
    %370 = vmatpush.msra.mxu0 %v41
    %371 = vmatpush.msra.mxu0 %v40
    %372 = vmatpush.msra.mxu0 %v39
    %373 = vmatpush.msra.mxu0 %v38
    %374 = vmatpush.msra.mxu0 %v37
    %375 = vmatpush.msra.mxu0 %v36
    %376 = vmatpush.msra.mxu0 %v35
    %377 = vmatpush.msra.mxu0 %v34
    %378 = vmatpush.msra.mxu0 %v33
    %379 = vmatpush.msra.mxu0 %v32
    %380 = vmatpush.msra.mxu0 %v31
    %381 = vmatmul.f32.gmra.mxu0 %v363
    %v382 = vpop.f32.mrf.mxu0
    %v383 = vadd.f32 %v193, %v382
    %384 = vmatmul.f32.gmra.mxu0 %v364
    %v385 = vpop.f32.mrf.mxu0
    %v386 = vadd.f32 %v193, %v385
    %387 = vdwg.mxu0
    %s388 = scalar_lea.vmem [#allocation5], 16
    %389 = vst [vmem:[%s388] sm:$0xff] %v383
    %390 = vst [vmem:[%s388 + $0x8] sm:$0xff] %v386
    // Predicated region
    $region18: #{tpu_custom_call.1} parent=1 // pred_check
      _
    $region19: #{tpu_custom_call.1} parent=1 // pred_check_branch
      %392 = sbr.rel (0) target = $region21
    $region20: #{tpu_custom_call.1} parent=1 // pred_region
      %394 = vsyncadd [#allocation4], 0
      %s395 = sshll.u32 [#allocation5], 4
      %s396 = int_to_ptr.vmem [resolvable:$true] %s395
      %s397 = sshll.u32 %s3, 4
      %s398 = int_to_ptr.hbm [resolvable:$true] %s397
      %403 = dma.vmem_to_hbm [thread:$0]  %s396, 512, %s398, [#allocation4], 128, 128, 8
    $region21: #{tpu_custom_call.1} parent=1 // pred_fallthru
      _
    // Predicated region
    $region22: #{tpu_custom_call.1} parent=1 // pred_check
      _
    $region23: #{tpu_custom_call.1} parent=1 // pred_check_branch
      %405 = sbr.rel (0) target = $region25
    $region24: #{tpu_custom_call.1} parent=1 // pred_region
      %407 = dma.done [#allocation4], 512
    $region25: #{tpu_custom_call.1} parent=1 // pred_fallthru
      _
    %408 = vsyncpa [#allocation3], 1
    %409 = vsyncpa [#allocation4], 1

</llo_original>
